<compile_context>
chip_gen: v7x
topology: tpu7x:2x2x1
jax: 0.10.0
libtpu: 0.0.40
codegen_flags: <defaults>
</compile_context>

<pallas_src>
import jax
import jax.numpy as jnp
from jax.experimental import pallas as pl
from jax.experimental.pallas import tpu as pltpu

_MIB = 1024 * 1024


def _vmem_capacity_bytes():
    """Physical VMEM per core, with a conservative (v7x-sized) fallback."""
    try:
        info = pltpu.get_tpu_info()
        cap = getattr(info, "vmem_capacity_bytes", None)
        if cap:
            return int(cap)
    except Exception:
        pass
    return 64 * _MIB


def _round_down(x, m):
    return max(m, (x // m) * m)


def _choose_tile(size, requested, align):
    """Full dim if it fits the request, else an `align`-multiple tile."""
    if size <= requested:
        return size
    return _round_down(requested, align)


# ----------------------------- kernels ------------------------------------


def _mlp_projector_single_kernel(x_ref, w1_ref, b1_ref, w2_ref, b2_ref, o_ref):
    # Whole problem in one block: fused Linear -> SiLU -> Linear.
    h = jnp.dot(x_ref[...], w1_ref[...], preferred_element_type=jnp.float32)
    h = h + b1_ref[...].astype(jnp.float32)
    h = h * jax.nn.sigmoid(h)                                   # SiLU in f32
    o = jnp.dot(h.astype(w2_ref.dtype), w2_ref[...],
                preferred_element_type=jnp.float32)
    o = o + b2_ref[...].astype(jnp.float32)
    o_ref[...] = o.astype(o_ref.dtype)


def _mlp_projector_tiled_kernel(x_ref, w1_ref, b1_ref, w2_ref, b2_ref, o_ref,
                                h_ref):
    # x_ref : [tb, in_features]                 (native dtype)
    # w1_ref: [in_features, inner_features]     (native dtype, single-buffered)
    # b1_ref: [1, inner_features]
    # w2_ref: [inner_features, tn]              (native dtype, N-tiled/streamed)
    # b2_ref: [1, tn]
    # o_ref : [tb, tn]
    # h_ref : [tb, inner_features] scratch in matmul-2 compute dtype,
    #         persists across N steps of a batch tile.

    # Matmul-1 + SiLU: once per batch tile, cast once into the scratch dtype.
    @pl.when(pl.program_id(1) == 0)
    def _():
        h = jnp.dot(x_ref[...], w1_ref[...], preferred_element_type=jnp.float32)
        h = h + b1_ref[...].astype(jnp.float32)
        h = h * jax.nn.sigmoid(h)                               # SiLU in f32
        h_ref[...] = h.astype(h_ref.dtype)

    # Matmul-2 on the current N tile, reusing the cached activation directly
    # (no per-step re-cast).
    o = jnp.dot(h_ref[...], w2_ref[...], preferred_element_type=jnp.float32)
    o = o + b2_ref[...].astype(jnp.float32)
    o_ref[...] = o.astype(o_ref.dtype)


# ----------------------------- wrapper ------------------------------------


def mlp_image_projector(features, w1, b1, w2, b2, *, num_image_tokens,
                        out_features, block_b=None, block_n=None):
    """features: [B, in_features] -> image_tokens: [B, num_image_tokens, out_features]"""
    B, in_features = features.shape
    inner_features = w1.shape[1]
    out_dim = w2.shape[1]
    assert w1.shape == (in_features, inner_features)
    assert w2.shape == (inner_features, out_dim)
    assert out_dim == out_features * num_image_tokens

    vmem_cap = _vmem_capacity_bytes()
    large_vmem = vmem_cap >= 96 * _MIB          # v5e / v6e (128 MiB physical)

    # Generation-aware tile requests: bigger on 128 MiB parts (amortize grid
    # step overhead, fewer W2 re-streams), tighter on 64 MiB (v7x) parts.
    if block_b is None:
        block_b = 512 if large_vmem else 256
    if block_n is None:
        block_n = 1024 if large_vmem else 512

    x_it = jnp.dtype(features.dtype).itemsize
    w1_it = jnp.dtype(w1.dtype).itemsize
    w2_it = jnp.dtype(w2.dtype).itemsize
    b1_it = jnp.dtype(b1.dtype).itemsize
    b2_it = jnp.dtype(b2.dtype).itemsize
    out_it = x_it
    h_dtype = w2.dtype                           # matmul-2 compute dtype
    h_it = jnp.dtype(h_dtype).itemsize

    # ---------------- tiny-problem fast path: one fused block ----------------
    if B <= block_b and out_dim <= block_n:
        full = lambda i: (0, 0)
        out_flat = pl.pallas_call(
            _mlp_projector_single_kernel,
            out_shape=jax.ShapeDtypeStruct((B, out_dim), features.dtype),
            grid_spec=pltpu.PrefetchScalarGridSpec(
                num_scalar_prefetch=0,
                grid=(1,),
                in_specs=[
                    pl.BlockSpec((B, in_features), full),
                    pl.BlockSpec((in_features, inner_features), full),
                    pl.BlockSpec((1, inner_features), full),
                    pl.BlockSpec((inner_features, out_dim), full),
                    pl.BlockSpec((1, out_dim), full),
                ],
                out_specs=pl.BlockSpec((B, out_dim), full),
            ),
            compiler_params=pltpu.CompilerParams(
                dimension_semantics=("arbitrary",)),
        )(features, w1, b1, w2, b2)
        return out_flat.reshape(-1, num_image_tokens, out_features)

    # ---------------- tiled path ----------------
    # N tile aligned to 256 (v6e/v7x MXU column width) when the request allows,
    # else 128 (lane width / v5e MXU); batch tile aligned to 16 (covers f32(8)
    # and bf16(16) sublane packing).
    n_align = 256 if (block_n % 256 == 0 and out_dim >= 256) else 128
    tn = _choose_tile(out_dim, block_n, n_align)
    tb = _choose_tile(B, block_b, 16)

    # v7x megacore: ensure >= 2 steps on the "parallel" batch axis when there
    # is enough work to split across the 2 TensorCores of a 64 MiB part.
    if (not large_vmem) and pl.cdiv(B, tb) < 2 and B >= 256:
        tb = _round_down(pl.cdiv(B, 2), 16)

    def vmem_need(tb_, tn_, w2_bufs):
        x_b = 2 * tb_ * in_features * x_it                     # double-buffered
        w1_b = 1 * in_features * inner_features * w1_it        # Buffered(1)
        b1_b = 8 * inner_features * max(b1_it, 4)              # padded sublanes
        w2_b = w2_bufs * inner_features * tn_ * w2_it
        b2_b = w2_bufs * 8 * tn_ * max(b2_it, 4)
        o_b = 2 * tb_ * tn_ * out_it
        h_b = tb_ * inner_features * h_it                      # scratch
        return x_b + w1_b + b1_b + w2_b + b2_b + o_b + h_b

    budget = int(vmem_cap * 0.75)       # leave headroom for compiler scratch
    w2_bufs = 3                         # extra buffer hides the long j==0 step
    while vmem_need(tb, tn, w2_bufs) > budget:
        if w2_bufs > 2:
            w2_bufs = 2
        elif tn > 128 and tn > n_align:
            tn = max(128, _round_down(tn // 2, 128))
        elif tb > 32:
            tb = _round_down(tb // 2, 16)
        else:
            break

    grid = (pl.cdiv(B, tb), pl.cdiv(out_dim, tn))
    n_batch_tiles = grid[0]

    vmem_limit = min(max(vmem_need(tb, tn, w2_bufs) + 16 * _MIB, 32 * _MIB),
                     int(vmem_cap * 0.9))

    cost = pl.CostEstimate(
        flops=2 * B * (in_features * inner_features
                       + inner_features * out_dim),
        transcendentals=B * inner_features,                    # sigmoid
        bytes_accessed=(features.size * x_it
                        + w1.size * w1_it
                        + b1.size * b1_it
                        # W2/b2 are re-streamed once per batch tile.
                        + n_batch_tiles * (w2.size * w2_it + b2.size * b2_it)
                        + B * out_dim * out_it),
    )

    out_flat = pl.pallas_call(
        _mlp_projector_tiled_kernel,
        out_shape=jax.ShapeDtypeStruct((B, out_dim), features.dtype),
        grid_spec=pltpu.PrefetchScalarGridSpec(
            num_scalar_prefetch=0,
            grid=grid,
            in_specs=[
                pl.BlockSpec((tb, in_features), lambda i, j: (i, 0)),
                # Constant index_maps -> single buffer (saves a W1 copy in VMEM).
                pl.BlockSpec((in_features, inner_features), lambda i, j: (0, 0),
                             pipeline_mode=pl.Buffered(1)),
                pl.BlockSpec((1, inner_features), lambda i, j: (0, 0),
                             pipeline_mode=pl.Buffered(1)),
                # Streamed W2 tiles, deeper pipelining when budget allows.
                pl.BlockSpec((inner_features, tn), lambda i, j: (0, j),
                             pipeline_mode=pl.Buffered(w2_bufs)),
                pl.BlockSpec((1, tn), lambda i, j: (0, j),
                             pipeline_mode=pl.Buffered(w2_bufs)),
            ],
            out_specs=pl.BlockSpec((tb, tn), lambda i, j: (i, j)),
            scratch_shapes=[pltpu.VMEM((tb, inner_features), h_dtype)],
        ),
        compiler_params=pltpu.CompilerParams(
            # N axis carries the cached activation in scratch -> "arbitrary";
            # batch axis is independent -> "parallel" (megacore / 2 TCs).
            dimension_semantics=("parallel", "arbitrary"),
            vmem_limit_bytes=vmem_limit,
        ),
        cost_estimate=cost,
    )(features, w1, b1, w2, b2)

    return out_flat.reshape(-1, num_image_tokens, out_features)


# ----------------------------- demo / test ---------------------------------


def xavier_normal(key, fan_in, fan_out, shape, dtype=jnp.float32):
    std = (2.0 / (fan_in + fan_out)) ** 0.5
    return std * jax.random.normal(key, shape, dtype=dtype)


def _build_and_check(B, in_features, out_features, num_image_tokens, mlp_ratio,
                     key, **kwargs):
    inner_features = int(in_features * mlp_ratio)
    out_dim = out_features * num_image_tokens
    k_x, k_w1, k_w2 = jax.random.split(key, 3)

    features = jax.random.normal(k_x, (B, in_features), dtype=jnp.float32)
    # Deterministic xavier_normal_ init; biases zero (as in init_weights()).
    # Weights stored transposed relative to PyTorch nn.Linear ([out,in]->[in,out]).
    w1 = xavier_normal(k_w1, in_features, inner_features,
                       (in_features, inner_features))
    b1 = jnp.zeros((1, inner_features), dtype=jnp.float32)
    w2 = xavier_normal(k_w2, inner_features, out_dim, (inner_features, out_dim))
    b2 = jnp.zeros((1, out_dim), dtype=jnp.float32)

    out = mlp_image_projector(features, w1, b1, w2, b2,
                              num_image_tokens=num_image_tokens,
                              out_features=out_features, **kwargs)
    out = jax.block_until_ready(out)

    # Pure-JAX reference.
    h_ref = features @ w1 + b1
    h_ref = h_ref * jax.nn.sigmoid(h_ref)
    ref = (h_ref @ w2 + b2).reshape(-1, num_image_tokens, out_features)

    assert out.shape == (B, num_image_tokens, out_features)
    err = float(jnp.max(jnp.abs(out - ref)))
    assert jnp.allclose(out, ref, atol=2e-4, rtol=2e-4), f"max abs err {err}"
    return out


if __name__ == "__main__":
    key = jax.random.PRNGKey(0)
    k1, k2 = jax.random.split(key)

    # Small config consistent with the module defaults -> single-block path.
    # in=32, mlp_ratio=4 -> inner=128; out_features=64, tokens=4 -> out_dim=256.
    _build_and_check(B=16, in_features=32, out_features=64,
                     num_image_tokens=4, mlp_ratio=4.0, key=k1)

    # Modest config exercising the tiled (streamed-W2, cached-activation) path:
    # grid = (3, 3) with tb=128, tn=256.
    _build_and_check(B=384, in_features=128, out_features=192,
                     num_image_tokens=4, mlp_ratio=4.0, key=k2,
                     block_b=128, block_n=256)

    print("KERNEL_OK")
</pallas_src>

<mosaic_0001>
module attributes {stable_mosaic.version = 11 : i64} {
  func.func @_mlp_projector_single_kernel(%arg0: i32, %arg1: memref<16x32xf32, #tpu.memory_space<vmem>>, %arg2: memref<32x128xf32, #tpu.memory_space<vmem>>, %arg3: memref<1x128xf32, #tpu.memory_space<vmem>>, %arg4: memref<128x256xf32, #tpu.memory_space<vmem>>, %arg5: memref<1x256xf32, #tpu.memory_space<vmem>>, %arg6: memref<16x256xf32, #tpu.memory_space<vmem>>) attributes {dimension_semantics = [#tpu.dimension_semantics<arbitrary>], iteration_bounds = array<i64: 1>, scalar_prefetch = 0 : i64, scratch_operands = 0 : i64, tpu.core_type = #tpu.core_type<tc>, window_params = [{pipeline_mode = #tpu.pipeline_mode<synchronous>, transform_indices = @transform_0, window_bounds = array<i64: 16, 32>}, {pipeline_mode = #tpu.pipeline_mode<synchronous>, transform_indices = @transform_1, window_bounds = array<i64: 32, 128>}, {pipeline_mode = #tpu.pipeline_mode<synchronous>, transform_indices = @transform_2, window_bounds = array<i64: 1, 128>}, {pipeline_mode = #tpu.pipeline_mode<synchronous>, transform_indices = @transform_3, window_bounds = array<i64: 128, 256>}, {pipeline_mode = #tpu.pipeline_mode<synchronous>, transform_indices = @transform_4, window_bounds = array<i64: 1, 256>}, {pipeline_mode = #tpu.pipeline_mode<synchronous>, transform_indices = @transform_5, window_bounds = array<i64: 16, 256>}]} {
    %c0 = arith.constant 0 : index
    %c0_0 = arith.constant 0 : index
    %0 = vector.load %arg1[%c0, %c0_0] : memref<16x32xf32, #tpu.memory_space<vmem>>, vector<16x32xf32>
    %c0_1 = arith.constant 0 : index
    %c0_2 = arith.constant 0 : index
    %1 = vector.load %arg2[%c0_1, %c0_2] : memref<32x128xf32, #tpu.memory_space<vmem>>, vector<32x128xf32>
    %cst = arith.constant dense<0.000000e+00> : vector<16x128xf32>
    %2 = tpu.matmul %0, %1, %cst {dimension_numbers = #tpu.dot_dimension_numbers<[1], [0], [0], [1], [0, 0, 1, 1], [], []>} : vector<16x32xf32>, vector<32x128xf32>, vector<16x128xf32> -> vector<16x128xf32>
    %c0_3 = arith.constant 0 : index
    %c0_4 = arith.constant 0 : index
    %3 = vector.load %arg3[%c0_3, %c0_4] : memref<1x128xf32, #tpu.memory_space<vmem>>, vector<1x128xf32>
    %4 = vector.broadcast %3 : vector<1x128xf32> to vector<16x128xf32>
    %5 = arith.addf %2, %4 : vector<16x128xf32>
    %6 = arith.negf %5 : vector<16x128xf32>
    %7 = math.exp %6 : vector<16x128xf32>
    %cst_5 = arith.constant 1.000000e+00 : f32
    %8 = vector.broadcast %cst_5 : f32 to vector<16x128xf32>
    %9 = arith.addf %8, %7 : vector<16x128xf32>
    %10 = arith.divf %8, %9 : vector<16x128xf32>
    %11 = arith.mulf %5, %10 : vector<16x128xf32>
    %c0_6 = arith.constant 0 : index
    %c0_7 = arith.constant 0 : index
    %12 = vector.load %arg4[%c0_6, %c0_7] : memref<128x256xf32, #tpu.memory_space<vmem>>, vector<128x256xf32>
    %cst_8 = arith.constant dense<0.000000e+00> : vector<16x256xf32>
    %13 = tpu.matmul %11, %12, %cst_8 {dimension_numbers = #tpu.dot_dimension_numbers<[1], [0], [0], [1], [0, 0, 1, 1], [], []>} : vector<16x128xf32>, vector<128x256xf32>, vector<16x256xf32> -> vector<16x256xf32>
    %c0_9 = arith.constant 0 : index
    %c0_10 = arith.constant 0 : index
    %14 = vector.load %arg5[%c0_9, %c0_10] : memref<1x256xf32, #tpu.memory_space<vmem>>, vector<1x256xf32>
    %15 = vector.broadcast %14 : vector<1x256xf32> to vector<16x256xf32>
    %16 = arith.addf %13, %15 : vector<16x256xf32>
    %c0_11 = arith.constant 0 : index
    %c0_12 = arith.constant 0 : index
    %17 = vector.load %arg6[%c0_11, %c0_12] : memref<16x256xf32, #tpu.memory_space<vmem>>, vector<16x256xf32>
    tpu.vector_store %arg6[%c0_11, %c0_12], %16 {strides = array<i32>} : memref<16x256xf32, #tpu.memory_space<vmem>>, vector<16x256xf32>,
    return
  }
  func.func @transform_0(%arg0: i32) -> (i32, i32) {
    %c0_i32 = arith.constant 0 : i32
    %c0_i32_0 = arith.constant 0 : i32
    %c0_i32_1 = arith.constant 0 : i32
    return %c0_i32, %c0_i32_0 : i32, i32
  }
  func.func @transform_1(%arg0: i32) -> (i32, i32) {
    %c0_i32 = arith.constant 0 : i32
    %c0_i32_0 = arith.constant 0 : i32
    %c0_i32_1 = arith.constant 0 : i32
    return %c0_i32, %c0_i32_0 : i32, i32
  }
  func.func @transform_2(%arg0: i32) -> (i32, i32) {
    %c0_i32 = arith.constant 0 : i32
    %c0_i32_0 = arith.constant 0 : i32
    %c0_i32_1 = arith.constant 0 : i32
    return %c0_i32, %c0_i32_0 : i32, i32
  }
  func.func @transform_3(%arg0: i32) -> (i32, i32) {
    %c0_i32 = arith.constant 0 : i32
    %c0_i32_0 = arith.constant 0 : i32
    %c0_i32_1 = arith.constant 0 : i32
    return %c0_i32, %c0_i32_0 : i32, i32
  }
  func.func @transform_4(%arg0: i32) -> (i32, i32) {
    %c0_i32 = arith.constant 0 : i32
    %c0_i32_0 = arith.constant 0 : i32
    %c0_i32_1 = arith.constant 0 : i32
    return %c0_i32, %c0_i32_0 : i32, i32
  }
  func.func @transform_5(%arg0: i32) -> (i32, i32) {
    %c0_i32 = arith.constant 0 : i32
    %c0_i32_0 = arith.constant 0 : i32
    %c0_i32_1 = arith.constant 0 : i32
    return %c0_i32, %c0_i32_0 : i32, i32
  }
}

</mosaic_0001>

<llo_original>
// kernel: tpu_custom_call.1
$region0: #{tpu_custom_call.1}
  #allocation0 [shape = 'u32[]', space=smem, size = 0x4, offset = 0x4, fixed_abs, tag = 'smem constant byte address 0x4 - core index']
  #allocation1 [shape = 'u32[144,128]{1,0:T(1,128)}', space=vmem, size = 0x12000, scoped, tag = 'internal scratch']
  %s0 = inlined_call_operand.hbm [shape: f32[16,32], index: 0, kind: input, shape index: {}]
  %s1 = inlined_call_operand.hbm [shape: f32[32,128], index: 1, kind: input, shape index: {}]
  %s2 = inlined_call_operand.vmem [shape: f32[1,128], index: 2, kind: input, shape index: {}]
  %s3 = inlined_call_operand.hbm [shape: f32[128,256], index: 3, kind: input, shape index: {}]
  %s4 = inlined_call_operand.vmem [shape: f32[1,256], index: 4, kind: input, shape index: {}]
  %s5 = inlined_call_operand.hbm [shape: f32[16,256], index: 5, kind: output, shape index: {}]
  %s6 = sld [smem:[#allocation0]]
  $region42: #{tpu_custom_call.1} parent=0
    _
  %s8 = ssub.s32 1, %s6
  %s9 = scalar_select 0, %s8, %s6
  $region1: #{tpu_custom_call.1} parent=0
    #allocation2 [shape = 'u8[8192]{0}', space=vmem, size = 0x2000, scoped, tag = 'input window, operand 0, single buffered']
    #allocation3 [shape = 's32[1]{0}', space=sflag, size = 0x4, scoped, tag = 'scoped memory for tpu_custom_call.1']
    #allocation4 [shape = 's32[1]{0}', space=sflag, size = 0x4, scoped, tag = 'scoped memory for tpu_custom_call.1']
    #allocation5 [shape = 'u8[16384]{0}', space=vmem, size = 0x4000, scoped, tag = 'input window, operand 1, single buffered']
    #allocation6 [shape = 's32[1]{0}', space=sflag, size = 0x4, scoped, tag = 'scoped memory for tpu_custom_call.1']
    #allocation7 [shape = 'u8[131072]{0}', space=vmem, size = 0x20000, scoped, tag = 'input window, operand 3, single buffered']
    #allocation8 [shape = 'u8[16384]{0}', space=vmem, size = 0x4000, scoped, tag = 'output window, operand 0, single buffered']
    %10 = vsyncpa [#allocation3], 0
    %11 = vsyncpa [#allocation6], 0
    %12 = vsyncpa [#allocation4], 0
    // Predicated region
    $region2: #{tpu_custom_call.1} parent=1 // pred_check
      _
    $region3: #{tpu_custom_call.1} parent=1 // pred_check_branch
      %14 = sbr.rel (0) target = $region5
    $region4: #{tpu_custom_call.1} parent=1 // pred_region
      %s16 = ssub.s32 256, 256
      %17 = vsyncadd [#allocation3], %s16
      %s18 = sshll.u32 [#allocation2], 4
      %s19 = int_to_ptr.vmem [resolvable:$true] %s18
      %24 = dma.hbm_to_vmem [thread:$0]  %s0, 256, %s19, [#allocation3], 128, 128, 8
    $region5: #{tpu_custom_call.1} parent=1 // pred_fallthru
      _
    // Predicated region
    $region6: #{tpu_custom_call.1} parent=1 // pred_check
      _
    $region7: #{tpu_custom_call.1} parent=1 // pred_check_branch
      %26 = sbr.rel (0) target = $region9
    $region8: #{tpu_custom_call.1} parent=1 // pred_region
      %s28 = ssub.s32 512, 512
      %29 = vsyncadd [#allocation6], %s28
      %s30 = sshll.u32 [#allocation5], 4
      %s31 = int_to_ptr.vmem [resolvable:$true] %s30
      %36 = dma.hbm_to_vmem [thread:$0]  %s1, 512, %s31, [#allocation6], 128, 128, 8
    $region9: #{tpu_custom_call.1} parent=1 // pred_fallthru
      _
    // Predicated region
    $region10: #{tpu_custom_call.1} parent=1 // pred_check
      _
    $region11: #{tpu_custom_call.1} parent=1 // pred_check_branch
      %38 = sbr.rel (0) target = $region13
    $region12: #{tpu_custom_call.1} parent=1 // pred_region
      _
    $region13: #{tpu_custom_call.1} parent=1 // pred_fallthru
      _
    // Predicated region
    $region14: #{tpu_custom_call.1} parent=1 // pred_check
      _
    $region15: #{tpu_custom_call.1} parent=1 // pred_check_branch
      %40 = sbr.rel (0) target = $region17
    $region16: #{tpu_custom_call.1} parent=1 // pred_region
      %s42 = ssub.s32 4096, 4096
      %43 = vsyncadd [#allocation6], %s42
      %s44 = sshll.u32 [#allocation7], 4
      %s45 = int_to_ptr.vmem [resolvable:$true] %s44
      %50 = dma.hbm_to_vmem [thread:$0]  %s3, 4096, %s45, [#allocation6], 256, 256, 16
    $region17: #{tpu_custom_call.1} parent=1 // pred_fallthru
      _
    // Predicated region
    $region18: #{tpu_custom_call.1} parent=1 // pred_check
      _
    $region19: #{tpu_custom_call.1} parent=1 // pred_check_branch
      %52 = sbr.rel (0) target = $region21
    $region20: #{tpu_custom_call.1} parent=1 // pred_region
      _
    $region21: #{tpu_custom_call.1} parent=1 // pred_fallthru
      _
    // Predicated region
    $region22: #{tpu_custom_call.1} parent=1 // pred_check
      _
    $region23: #{tpu_custom_call.1} parent=1 // pred_check_branch
      %54 = sbr.rel (0) target = $region25
    $region24: #{tpu_custom_call.1} parent=1 // pred_region
      %55 = dma.done [#allocation3], 256
    $region25: #{tpu_custom_call.1} parent=1 // pred_fallthru
      _
    // Predicated region
    $region26: #{tpu_custom_call.1} parent=1 // pred_check
      _
    $region27: #{tpu_custom_call.1} parent=1 // pred_check_branch
      %57 = sbr.rel (0) target = $region29
    $region28: #{tpu_custom_call.1} parent=1 // pred_region
      %58 = dma.done [#allocation6], 512
    $region29: #{tpu_custom_call.1} parent=1 // pred_fallthru
      _
    // Predicated region
    $region30: #{tpu_custom_call.1} parent=1 // pred_check
      _
    $region31: #{tpu_custom_call.1} parent=1 // pred_check_branch
      %60 = sbr.rel (0) target = $region33
    $region32: #{tpu_custom_call.1} parent=1 // pred_region
      %61 = dma.done [#allocation6], 4096
    $region33: #{tpu_custom_call.1} parent=1 // pred_fallthru
      _
    %v62 = vld [vmem:[#allocation2] sm:$0xff]
    %v63 = vld [vmem:[#allocation2 + $0x8] sm:$0xff]
    %v64 = vld [vmem:[#allocation5] sm:$0xff]
    %v65 = vld [vmem:[#allocation5 + $0x8] sm:$0xff]
    %v66 = vld [vmem:[#allocation5 + $0x10] sm:$0xff]
    %v67 = vld [vmem:[#allocation5 + $0x18] sm:$0xff]
    %v68 = vld [vmem:[%s2] sm:$0x1]
    %v70 = vlaneseq
    %v71 = vshrl.u32 %v70, 7
    %v72 = vsub.s32 0, %v71
    %v73 = vrot.slane %v68, %v72
    %vm75 = vcmask 261120
    %v77 = vsel %vm75, %v62, 0
    %v80 = vsel %vm75, %v63, 0
    %82 = vmatprep.subr.mxu0 0.0
    %83 = vmatpush1.msra.mxu0 %v64
    %84 = vmatprep.subr.mxu0 0.0
    %85 = vmatpush1.msra.mxu0 %v65
    %86 = vmatprep.subr.mxu0 0.0
    %87 = vmatpush1.msra.mxu0 %v66
    %88 = vmatprep.subr.mxu0 0.0
    %89 = vmatpush1.msra.mxu0 %v67
    %90 = vmatprep.subr.mxu0 0.0
    %91 = vmatpush1.msra.mxu0 0.0
    %92 = vmatprep.subr.mxu0 0.0
    %93 = vmatpush1.msra.mxu0 0.0
    %94 = vmatprep.subr.mxu0 0.0
    %95 = vmatpush1.msra.mxu0 0.0
    %96 = vmatprep.subr.mxu0 0.0
    %97 = vmatpush1.msra.mxu0 0.0
    %98 = vmatprep.subr.mxu0 0.0
    %99 = vmatpush1.msra.mxu0 0.0
    %100 = vmatprep.subr.mxu0 0.0
    %101 = vmatpush1.msra.mxu0 0.0
    %102 = vmatprep.subr.mxu0 0.0
    %103 = vmatpush1.msra.mxu0 0.0
    %104 = vmatprep.subr.mxu0 0.0
    %105 = vmatpush1.msra.mxu0 0.0
    %106 = vmatprep.subr.mxu0 0.0
    %107 = vmatpush1.msra.mxu0 0.0
    %108 = vmatprep.subr.mxu0 0.0
    %109 = vmatpush1.msra.mxu0 0.0
    %110 = vmatprep.subr.mxu0 0.0
    %111 = vmatpush1.msra.mxu0 0.0
    %112 = vmatprep.subr.mxu0 0.0
    %113 = vmatpush1.msra.mxu0 0.0
    %114 = vmatprep.subr.mxu0 0.0
    %115 = vmatpush1.msra.mxu0 0.0
    %116 = vmatprep.subr.mxu0 0.0
    %117 = vmatpush1.msra.mxu0 0.0
    %118 = vmatprep.subr.mxu0 0.0
    %119 = vmatpush1.msra.mxu0 0.0
    %120 = vmatprep.subr.mxu0 0.0
    %121 = vmatpush1.msra.mxu0 0.0
    %122 = vmatprep.subr.mxu0 0.0
    %123 = vmatpush1.msra.mxu0 0.0
    %124 = vmatprep.subr.mxu0 0.0
    %125 = vmatpush1.msra.mxu0 0.0
    %126 = vmatprep.subr.mxu0 0.0
    %127 = vmatpush1.msra.mxu0 0.0
    %128 = vmatprep.subr.mxu0 0.0
    %129 = vmatpush1.msra.mxu0 0.0
    %130 = vmatprep.subr.mxu0 0.0
    %131 = vmatpush1.msra.mxu0 0.0
    %132 = vmatprep.subr.mxu0 0.0
    %133 = vmatpush1.msra.mxu0 0.0
    %134 = vmatprep.subr.mxu0 0.0
    %135 = vmatpush1.msra.mxu0 0.0
    %136 = vmatprep.subr.mxu0 0.0
    %137 = vmatpush1.msra.mxu0 0.0
    %138 = vmatprep.subr.mxu0 0.0
    %139 = vmatpush1.msra.mxu0 0.0
    %140 = vmatprep.subr.mxu0 0.0
    %141 = vmatpush1.msra.mxu0 0.0
    %142 = vmatprep.subr.mxu0 0.0
    %143 = vmatpush1.msra.mxu0 0.0
    %144 = vmatprep.subr.mxu0 0.0
    %145 = vmatpush1.msra.mxu0 0.0
    %146 = vmatprep.mubr.f32.mxu0 0.0
    %147 = vmatmul.mubr.f32.gmra.mrb[0].mxu0 %v77
    %v148 = vpop.f32.mrb[0].mxu0
    %v149 = vadd.f32 %v73, %v148
    %v150 = vpop.f32.mrb[0].mxu0
    %151 = vmatprep.mubr.f32.mxu0 0.0
    %152 = vmatmul.mubr.f32.gmra.mrb[0].mxu0 %v80
    %v153 = vpop.f32.mrb[0].mxu0
    %v154 = vadd.f32 %v73, %v153
    %v155 = vpop.f32.mrb[0].mxu0
    %156 = vdwg.mxu0
    %v157 = vxor.u32 %v149, 2147483648
    %v158 = vxor.u32 %v154, 2147483648
    %v159 = vmul.f32 %v157, 1.442695
    %v160 = vpow.pop %v159
    %v161 = vmul.f32 %v158, 1.442695
    %v162 = vpow.pop %v161
    %v163 = vadd.f32 %v160, 1.0
    %v164 = vadd.f32 %v162, 1.0
    %v165 = vrcp.pop %v163
    %v166 = vmul.f32 1.0, %v165
    %v167 = vrcp.pop %v164
    %v168 = vmul.f32 1.0, %v167
    %v169 = vmul.f32 %v149, %v166
    %v170 = vmul.f32 %v154, %v168
    %v171 = vld [vmem:[#allocation7] sm:$0xff]
    %v172 = vld [vmem:[#allocation7 + $0x8] sm:$0xff]
    %v173 = vld [vmem:[#allocation7 + $0x10] sm:$0xff]
    %v174 = vld [vmem:[#allocation7 + $0x18] sm:$0xff]
    %v175 = vld [vmem:[#allocation7 + $0x20] sm:$0xff]
    %v176 = vld [vmem:[#allocation7 + $0x28] sm:$0xff]
    %v177 = vld [vmem:[#allocation7 + $0x30] sm:$0xff]
    %v178 = vld [vmem:[#allocation7 + $0x38] sm:$0xff]
    %v179 = vld [vmem:[#allocation7 + $0x40] sm:$0xff]
    %v180 = vld [vmem:[#allocation7 + $0x48] sm:$0xff]
    %v181 = vld [vmem:[#allocation7 + $0x50] sm:$0xff]
    %v182 = vld [vmem:[#allocation7 + $0x58] sm:$0xff]
    %v183 = vld [vmem:[#allocation7 + $0x60] sm:$0xff]
    %v184 = vld [vmem:[#allocation7 + $0x68] sm:$0xff]
    %v185 = vld [vmem:[#allocation7 + $0x70] sm:$0xff]
    %v186 = vld [vmem:[#allocation7 + $0x78] sm:$0xff]
    %v187 = vld [vmem:[#allocation7 + $0x80] sm:$0xff]
    %v188 = vld [vmem:[#allocation7 + $0x88] sm:$0xff]
    %v189 = vld [vmem:[#allocation7 + $0x90] sm:$0xff]
    %v190 = vld [vmem:[#allocation7 + $0x98] sm:$0xff]
    %v191 = vld [vmem:[#allocation7 + $0xa0] sm:$0xff]
    %v192 = vld [vmem:[#allocation7 + $0xa8] sm:$0xff]
    %v193 = vld [vmem:[#allocation7 + $0xb0] sm:$0xff]
    %v194 = vld [vmem:[#allocation7 + $0xb8] sm:$0xff]
    %v195 = vld [vmem:[#allocation7 + $0xc0] sm:$0xff]
    %v196 = vld [vmem:[#allocation7 + $0xc8] sm:$0xff]
    %v197 = vld [vmem:[#allocation7 + $0xd0] sm:$0xff]
    %v198 = vld [vmem:[#allocation7 + $0xd8] sm:$0xff]
    %v199 = vld [vmem:[#allocation7 + $0xe0] sm:$0xff]
    %v200 = vld [vmem:[#allocation7 + $0xe8] sm:$0xff]
    %v201 = vld [vmem:[#allocation7 + $0xf0] sm:$0xff]
    %v202 = vld [vmem:[#allocation7 + $0xf8] sm:$0xff]
    %v203 = vld [vmem:[%s4] sm:$0x3]
    %v205 = vlaneseq
    %v206 = vshrl.u32 %v205, 7
    %v207 = vsub.s32 0, %v206
    %v208 = vrot.slane %v203, %v207
    %v209 = vlaneseq
    %v210 = vshrl.u32 %v209, 7
    %v211 = vsub.s32 1, %v210
    %v212 = vrot.slane %v203, %v211
    %215 = vmatprep.subr.mxu0 %v172
    %216 = vmatpush1.msra.mxu0 %v171
    %217 = vmatprep.subr.mxu0 %v174
    %218 = vmatpush1.msra.mxu0 %v173
    %219 = vmatprep.subr.mxu0 %v176
    %220 = vmatpush1.msra.mxu0 %v175
    %221 = vmatprep.subr.mxu0 %v178
    %222 = vmatpush1.msra.mxu0 %v177
    %223 = vmatprep.subr.mxu0 %v180
    %224 = vmatpush1.msra.mxu0 %v179
    %225 = vmatprep.subr.mxu0 %v182
    %226 = vmatpush1.msra.mxu0 %v181
    %227 = vmatprep.subr.mxu0 %v184
    %228 = vmatpush1.msra.mxu0 %v183
    %229 = vmatprep.subr.mxu0 %v186
    %230 = vmatpush1.msra.mxu0 %v185
    %231 = vmatprep.subr.mxu0 %v188
    %232 = vmatpush1.msra.mxu0 %v187
    %233 = vmatprep.subr.mxu0 %v190
    %234 = vmatpush1.msra.mxu0 %v189
    %235 = vmatprep.subr.mxu0 %v192
    %236 = vmatpush1.msra.mxu0 %v191
    %237 = vmatprep.subr.mxu0 %v194
    %238 = vmatpush1.msra.mxu0 %v193
    %239 = vmatprep.subr.mxu0 %v196
    %240 = vmatpush1.msra.mxu0 %v195
    %241 = vmatprep.subr.mxu0 %v198
    %242 = vmatpush1.msra.mxu0 %v197
    %243 = vmatprep.subr.mxu0 %v200
    %244 = vmatpush1.msra.mxu0 %v199
    %245 = vmatprep.subr.mxu0 %v202
    %246 = vmatpush1.msra.mxu0 %v201
    %247 = vmatprep.subr.mxu0 0.0
    %248 = vmatpush1.msra.mxu0 0.0
    %249 = vmatprep.subr.mxu0 0.0
    %250 = vmatpush1.msra.mxu0 0.0
    %251 = vmatprep.subr.mxu0 0.0
    %252 = vmatpush1.msra.mxu0 0.0
    %253 = vmatprep.subr.mxu0 0.0
    %254 = vmatpush1.msra.mxu0 0.0
    %255 = vmatprep.subr.mxu0 0.0
    %256 = vmatpush1.msra.mxu0 0.0
    %257 = vmatprep.subr.mxu0 0.0
    %258 = vmatpush1.msra.mxu0 0.0
    %259 = vmatprep.subr.mxu0 0.0
    %260 = vmatpush1.msra.mxu0 0.0
    %261 = vmatprep.subr.mxu0 0.0
    %262 = vmatpush1.msra.mxu0 0.0
    %263 = vmatprep.subr.mxu0 0.0
    %264 = vmatpush1.msra.mxu0 0.0
    %265 = vmatprep.subr.mxu0 0.0
    %266 = vmatpush1.msra.mxu0 0.0
    %267 = vmatprep.subr.mxu0 0.0
    %268 = vmatpush1.msra.mxu0 0.0
    %269 = vmatprep.subr.mxu0 0.0
    %270 = vmatpush1.msra.mxu0 0.0
    %271 = vmatprep.subr.mxu0 0.0
    %272 = vmatpush1.msra.mxu0 0.0
    %273 = vmatprep.subr.mxu0 0.0
    %274 = vmatpush1.msra.mxu0 0.0
    %275 = vmatprep.subr.mxu0 0.0
    %276 = vmatpush1.msra.mxu0 0.0
    %277 = vmatprep.subr.mxu0 0.0
    %278 = vmatpush1.msra.mxu0 0.0
    %279 = vmatprep.mubr.f32.mxu0 0.0
    %280 = vmatmul.mubr.f32.gmra.mrb[0].mxu0 %v169
    %v281 = vpop.f32.mrb[0].mxu0
    %v282 = vadd.f32 %v208, %v281
    %v283 = vpop.f32.mrb[0].mxu0
    %v284 = vadd.f32 %v212, %v283
    %285 = vmatprep.mubr.f32.mxu0 0.0
    %286 = vmatmul.mubr.f32.gmra.mrb[0].mxu0 %v170
    %v287 = vpop.f32.mrb[0].mxu0
    %v288 = vadd.f32 %v208, %v287
    %v289 = vpop.f32.mrb[0].mxu0
    %v290 = vadd.f32 %v212, %v289
    %291 = vdwg.mxu0
    %292 = vst [vmem:[#allocation8] sm:$0xff] %v282
    %293 = vst [vmem:[#allocation8 + $0x8] sm:$0xff] %v284
    %294 = vst [vmem:[#allocation8 + $0x10] sm:$0xff] %v288
    %295 = vst [vmem:[#allocation8 + $0x18] sm:$0xff] %v290
    // Predicated region
    $region34: #{tpu_custom_call.1} parent=1 // pred_check
      _
    $region35: #{tpu_custom_call.1} parent=1 // pred_check_branch
      %297 = sbr.rel (0) target = $region37
    $region36: #{tpu_custom_call.1} parent=1 // pred_region
      %s299 = ssub.s32 512, 512
      %300 = vsyncadd [#allocation4], %s299
      %s301 = sshll.u32 [#allocation8], 4
      %s302 = int_to_ptr.vmem [resolvable:$true] %s301
      %307 = dma.vmem_to_hbm [thread:$0]  %s302, 512, %s5, [#allocation4], 256, 256, 16
    $region37: #{tpu_custom_call.1} parent=1 // pred_fallthru
      _
    // Predicated region
    $region38: #{tpu_custom_call.1} parent=1 // pred_check
      _
    $region39: #{tpu_custom_call.1} parent=1 // pred_check_branch
      %309 = sbr.rel (0) target = $region41
    $region40: #{tpu_custom_call.1} parent=1 // pred_region
      %310 = dma.done [#allocation4], 512
    $region41: #{tpu_custom_call.1} parent=1 // pred_fallthru
      _
    %311 = vsyncpa [#allocation3], 1
    %312 = vsyncpa [#allocation6], 1
    %313 = vsyncpa [#allocation4], 1

</llo_original>
